<compile_context>
chip_gen: v7x
topology: tpu7x:2x2x1
jax: 0.10.0
libtpu: 0.0.40
codegen_flags: <defaults>
</compile_context>

<pallas_src>
import math

import jax
import jax.numpy as jnp
from jax.experimental import pallas as pl
from jax.experimental.pallas import tpu as pltpu


def _round_up(x, m):
    return (x + m - 1) // m * m


def _embed_kernel(patches_ref, w_ref, add_ref, out_ref):
    """One row-tile of the patch embedding.

    patches_ref: (TM, P_pad)    flattened patches (zero-padded cols/rows)
    w_ref:       (P_pad, D_pad) linear weight in x @ W layout (grid-invariant)
    add_ref:     (TM, D_pad)    bias + pos_embedding[1:], tiled per image
                                (grid-invariant)
    out_ref:     (TM, D_pad)    embedded patch rows
    """
    acc = jnp.dot(patches_ref[...], w_ref[...],
                  preferred_element_type=jnp.float32)          # MXU, f32 acc
    out_ref[...] = (acc + add_ref[...]).astype(out_ref.dtype)  # fused epilogue


def image_embedder_forward(feat_nchw, w_t, bias, cls_token, pos_embedding,
                           *, patch_size, target_rows=256,
                           compute_dtype=jnp.float32):
    """feat_nchw: (B, C, H, W) post-backbone feature map.  Returns (B, N+1, D).

    For v6e/v7x pass compute_dtype=jnp.bfloat16 to halve HBM traffic on the
    dominant inputs (patches / weight); the accumulate and epilogue stay f32.
    """
    B, C, H, W = feat_nchw.shape
    assert H % patch_size == 0 and W % patch_size == 0
    h, w = H // patch_size, W // patch_size
    N = h * w
    P = C * patch_size * patch_size
    D = w_t.shape[1]

    # --- glue: einops 'b c (h p1) (w p2) -> b (h w) (p1 p2 c)' ---------------
    x = feat_nchw.astype(compute_dtype)
    x = x.reshape(B, C, h, patch_size, w, patch_size)
    x = x.transpose(0, 2, 4, 3, 5, 1)                  # b h w p1 p2 c
    patches = x.reshape(B * N, P)                      # (B*N, P)

    # --- row / lane tiling ----------------------------------------------------
    # A tile always covers an integer number of whole images (g images, TM =
    # g*N rows) so the grid-invariant (bias + pos) add lines up with the rows,
    # and TM is a multiple of 8 sublanes.
    g_unit = 8 // math.gcd(N, 8)                       # images/tile for alignment
    g = max(1, target_rows // N)                       # aim for ~target_rows rows
    g = max(g_unit, (g // g_unit) * g_unit)            # multiple of g_unit
    g = min(g, _round_up(B, g_unit))                   # don't over-pad tiny batches
    TM = g * N                                         # rows per grid step

    P_pad = _round_up(P, 128)                          # lane-dense input
    D_pad = _round_up(D, 128)                          # lane-dense output
    B_pad = _round_up(B, g)
    R_pad = B_pad * N                                  # rows, multiple of TM

    patches_p = jnp.pad(patches, ((0, R_pad - B * N), (0, P_pad - P)))
    w_p = jnp.pad(w_t.astype(compute_dtype), ((0, P_pad - P), (0, D_pad - D)))

    # Fold bias + positional embedding (patch rows) once; tile per image so it
    # matches the TM-row tile.  Kept in f32 (cheap on VPU, exact epilogue).
    body_add = (bias.reshape(1, D) + pos_embedding[1:, :]).astype(jnp.float32)
    add_tile = jnp.pad(jnp.tile(body_add, (g, 1)), ((0, 0), (0, D_pad - D)))

    grid = (R_pad // TM,)
    grid_spec = pltpu.PrefetchScalarGridSpec(
        num_scalar_prefetch=0,
        grid=grid,
        in_specs=[
            pl.BlockSpec((TM, P_pad), lambda i: (i, 0)),     # patch row tile
            pl.BlockSpec((P_pad, D_pad), lambda i: (0, 0)),  # weight (invariant)
            pl.BlockSpec((TM, D_pad), lambda i: (0, 0)),     # bias+pos (invariant)
        ],
        out_specs=pl.BlockSpec((TM, D_pad), lambda i: (i, 0)),
    )

    body = pl.pallas_call(
        _embed_kernel,
        out_shape=jax.ShapeDtypeStruct((R_pad, D_pad), jnp.float32),
        grid_spec=grid_spec,
        compiler_params=pltpu.CompilerParams(
            dimension_semantics=("parallel",),
            vmem_limit_bytes=32 * 1024 * 1024,
        ),
    )(patches_p, w_p, add_tile)

    body = body[:B * N, :D].reshape(B, N, D)           # drop padded rows/cols

    # CLS row (+ its positional embedding) is a constant; prepend outside the
    # hot path.
    cls_row = (cls_token.reshape(1, D) + pos_embedding[:1, :]).astype(body.dtype)
    cls_rows = jnp.broadcast_to(cls_row[None], (B, 1, D))
    out = jnp.concatenate([cls_rows, body], axis=1)    # (B, N+1, D)
    return out


def _reference(feat_nchw, w_t, bias, cls_token, pos_embedding, *, patch_size):
    """Pure-JAX reference of the same forward pass."""
    B, C, H, W = feat_nchw.shape
    h, w = H // patch_size, W // patch_size
    x = feat_nchw.reshape(B, C, h, patch_size, w, patch_size)
    x = x.transpose(0, 2, 4, 3, 5, 1).reshape(B, h * w, C * patch_size ** 2)
    x = x.astype(jnp.float32) @ w_t + bias                      # (B, N, D)
    cls = jnp.broadcast_to(cls_token[None], (B, 1, w_t.shape[1]))
    x = jnp.concatenate([cls, x], axis=1)
    x = x + pos_embedding[None]
    return x


if __name__ == "__main__":
    # Small, deterministic configuration consistent with the module:
    #   dim=32, "image" (feature-map) size=16, patch_size=4, channels=4
    B, C, H, W = 2, 4, 16, 16
    patch_size = 4
    dim = 32
    num_patches = (H // patch_size) * (W // patch_size)        # 16
    patch_dim = C * patch_size * patch_size                    # 64

    key = jax.random.PRNGKey(0)
    k_feat, k_w, k_b, k_cls, k_pos = jax.random.split(key, 5)

    feat = jax.random.normal(k_feat, (B, C, H, W), dtype=jnp.float32)

    # nn.Linear(patch_dim, dim): weight (dim, patch_dim), bias (dim,)
    w = jax.random.normal(k_w, (dim, patch_dim), dtype=jnp.float32) * 0.02
    w_t = jnp.transpose(w)                                     # (patch_dim, dim)
    bias = jax.random.normal(k_b, (1, dim), dtype=jnp.float32) * 0.02

    # cls_token (1, 1, dim) -> (1, dim); pos_embedding (1, N+1, dim) -> (N+1, dim)
    cls_token = jax.random.normal(k_cls, (1, dim), dtype=jnp.float32)
    pos_embedding = jax.random.normal(k_pos, (num_patches + 1, dim),
                                      dtype=jnp.float32)

    out = image_embedder_forward(feat, w_t, bias, cls_token, pos_embedding,
                                 patch_size=patch_size)
    out = jax.block_until_ready(out)

    ref = _reference(feat, w_t, bias, cls_token, pos_embedding,
                     patch_size=patch_size)
    assert out.shape == (B, num_patches + 1, dim), out.shape
    assert jnp.allclose(out, ref, atol=1e-5, rtol=1e-5), "mismatch vs reference"

    print("KERNEL_OK")
</pallas_src>

<mosaic_0001>
module attributes {stable_mosaic.version = 11 : i64} {
  func.func @_embed_kernel(%arg0: i32, %arg1: memref<32x128xf32, #tpu.memory_space<vmem>>, %arg2: memref<128x128xf32, #tpu.memory_space<vmem>>, %arg3: memref<32x128xf32, #tpu.memory_space<vmem>>, %arg4: memref<32x128xf32, #tpu.memory_space<vmem>>) attributes {dimension_semantics = [#tpu.dimension_semantics<parallel>], iteration_bounds = array<i64: 1>, scalar_prefetch = 0 : i64, scratch_operands = 0 : i64, tpu.core_type = #tpu.core_type<tc>, window_params = [{transform_indices = @transform_0, window_bounds = array<i64: 32, 128>}, {pipeline_mode = #tpu.pipeline_mode<synchronous>, transform_indices = @transform_1, window_bounds = array<i64: 128, 128>}, {pipeline_mode = #tpu.pipeline_mode<synchronous>, transform_indices = @transform_2, window_bounds = array<i64: 32, 128>}, {transform_indices = @transform_3, window_bounds = array<i64: 32, 128>}]} {
    %c0 = arith.constant 0 : index
    %c0_0 = arith.constant 0 : index
    %0 = vector.load %arg1[%c0, %c0_0] : memref<32x128xf32, #tpu.memory_space<vmem>>, vector<32x128xf32>
    %c0_1 = arith.constant 0 : index
    %c0_2 = arith.constant 0 : index
    %1 = vector.load %arg2[%c0_1, %c0_2] : memref<128x128xf32, #tpu.memory_space<vmem>>, vector<128x128xf32>
    %cst = arith.constant dense<0.000000e+00> : vector<32x128xf32>
    %2 = tpu.matmul %0, %1, %cst {dimension_numbers = #tpu.dot_dimension_numbers<[1], [0], [0], [1], [0, 0, 1, 1], [], []>} : vector<32x128xf32>, vector<128x128xf32>, vector<32x128xf32> -> vector<32x128xf32>
    %c0_3 = arith.constant 0 : index
    %c0_4 = arith.constant 0 : index
    %3 = vector.load %arg3[%c0_3, %c0_4] : memref<32x128xf32, #tpu.memory_space<vmem>>, vector<32x128xf32>
    %4 = arith.addf %2, %3 : vector<32x128xf32>
    %c0_5 = arith.constant 0 : index
    %c0_6 = arith.constant 0 : index
    %5 = vector.load %arg4[%c0_5, %c0_6] : memref<32x128xf32, #tpu.memory_space<vmem>>, vector<32x128xf32>
    tpu.vector_store %arg4[%c0_5, %c0_6], %4 {strides = array<i32>} : memref<32x128xf32, #tpu.memory_space<vmem>>, vector<32x128xf32>,
    return
  }
  func.func @transform_0(%arg0: i32) -> (i32, i32) {
    %c0_i32 = arith.constant 0 : i32
    %c0_i32_0 = arith.constant 0 : i32
    return %arg0, %c0_i32 : i32, i32
  }
  func.func @transform_1(%arg0: i32) -> (i32, i32) {
    %c0_i32 = arith.constant 0 : i32
    %c0_i32_0 = arith.constant 0 : i32
    %c0_i32_1 = arith.constant 0 : i32
    return %c0_i32, %c0_i32_0 : i32, i32
  }
  func.func @transform_2(%arg0: i32) -> (i32, i32) {
    %c0_i32 = arith.constant 0 : i32
    %c0_i32_0 = arith.constant 0 : i32
    %c0_i32_1 = arith.constant 0 : i32
    return %c0_i32, %c0_i32_0 : i32, i32
  }
  func.func @transform_3(%arg0: i32) -> (i32, i32) {
    %c0_i32 = arith.constant 0 : i32
    %c0_i32_0 = arith.constant 0 : i32
    return %arg0, %c0_i32 : i32, i32
  }
}

</mosaic_0001>

<llo_original>
// kernel: tpu_custom_call.1
$region0: #{tpu_custom_call.1}
  #allocation0 [shape = 'u32[]', space=smem, size = 0x4, offset = 0x4, fixed_abs, tag = 'smem constant byte address 0x4 - core index']
  #allocation1 [shape = 'u32[144,128]{1,0:T(1,128)}', space=vmem, size = 0x12000, scoped, tag = 'internal scratch']
  %s0 = inlined_call_operand.hbm [shape: f32[32,128], index: 0, kind: input, shape index: {}]
  %s1 = inlined_call_operand.hbm [shape: f32[128,128], index: 1, kind: input, shape index: {}]
  %s2 = inlined_call_operand.hbm [shape: f32[32,128], index: 2, kind: input, shape index: {}]
  %s3 = inlined_call_operand.hbm [shape: f32[32,128], index: 3, kind: output, shape index: {}]
  %s4 = sld [smem:[#allocation0]]
  $region34: #{tpu_custom_call.1} parent=0
    _
  %s6 = ssub.s32 1, %s4
  %s7 = scalar_select 0, %s6, %s4
  $region1: #{tpu_custom_call.1} parent=0
    #allocation2 [shape = 'u8[16384]{0}', space=vmem, size = 0x4000, scoped, tag = 'input window, operand 0, single buffered']
    #allocation3 [shape = 's32[1]{0}', space=sflag, size = 0x4, scoped, tag = 'scoped memory for tpu_custom_call.1']
    #allocation4 [shape = 's32[1]{0}', space=sflag, size = 0x4, scoped, tag = 'scoped memory for tpu_custom_call.1']
    #allocation5 [shape = 'u8[65536]{0}', space=vmem, size = 0x10000, scoped, tag = 'input window, operand 1, single buffered']
    #allocation6 [shape = 's32[1]{0}', space=sflag, size = 0x4, scoped, tag = 'scoped memory for tpu_custom_call.1']
    #allocation7 [shape = 'u8[16384]{0}', space=vmem, size = 0x4000, scoped, tag = 'input window, operand 2, single buffered']
    #allocation8 [shape = 'u8[16384]{0}', space=vmem, size = 0x4000, scoped, tag = 'output window, operand 0, single buffered']
    %8 = vsyncpa [#allocation3], 0
    %9 = vsyncpa [#allocation6], 0
    %10 = vsyncpa [#allocation4], 0
    // Predicated region
    $region2: #{tpu_custom_call.1} parent=1 // pred_check
      _
    $region3: #{tpu_custom_call.1} parent=1 // pred_check_branch
      %12 = sbr.rel (0) target = $region5
    $region4: #{tpu_custom_call.1} parent=1 // pred_region
      %s14 = ssub.s32 512, 512
      %15 = vsyncadd [#allocation3], %s14
      %s16 = sshll.u32 [#allocation2], 4
      %s17 = int_to_ptr.vmem [resolvable:$true] %s16
      %22 = dma.hbm_to_vmem [thread:$0]  %s0, 512, %s17, [#allocation3], 128, 128, 8
    $region5: #{tpu_custom_call.1} parent=1 // pred_fallthru
      _
    // Predicated region
    $region6: #{tpu_custom_call.1} parent=1 // pred_check
      _
    $region7: #{tpu_custom_call.1} parent=1 // pred_check_branch
      %24 = sbr.rel (0) target = $region9
    $region8: #{tpu_custom_call.1} parent=1 // pred_region
      %s26 = ssub.s32 2048, 2048
      %27 = vsyncadd [#allocation6], %s26
      %s28 = sshll.u32 [#allocation5], 4
      %s29 = int_to_ptr.vmem [resolvable:$true] %s28
      %34 = dma.hbm_to_vmem [thread:$0]  %s1, 2048, %s29, [#allocation6], 128, 128, 8
    $region9: #{tpu_custom_call.1} parent=1 // pred_fallthru
      _
    // Predicated region
    $region10: #{tpu_custom_call.1} parent=1 // pred_check
      _
    $region11: #{tpu_custom_call.1} parent=1 // pred_check_branch
      %36 = sbr.rel (0) target = $region13
    $region12: #{tpu_custom_call.1} parent=1 // pred_region
      %s38 = ssub.s32 512, 512
      %39 = vsyncadd [#allocation6], %s38
      %s40 = sshll.u32 [#allocation7], 4
      %s41 = int_to_ptr.vmem [resolvable:$true] %s40
      %46 = dma.hbm_to_vmem [thread:$0]  %s2, 512, %s41, [#allocation6], 128, 128, 8
    $region13: #{tpu_custom_call.1} parent=1 // pred_fallthru
      _
    // Predicated region
    $region14: #{tpu_custom_call.1} parent=1 // pred_check
      _
    $region15: #{tpu_custom_call.1} parent=1 // pred_check_branch
      %48 = sbr.rel (0) target = $region17
    $region16: #{tpu_custom_call.1} parent=1 // pred_region
      %49 = dma.done [#allocation3], 512
    $region17: #{tpu_custom_call.1} parent=1 // pred_fallthru
      _
    // Predicated region
    $region18: #{tpu_custom_call.1} parent=1 // pred_check
      _
    $region19: #{tpu_custom_call.1} parent=1 // pred_check_branch
      %51 = sbr.rel (0) target = $region21
    $region20: #{tpu_custom_call.1} parent=1 // pred_region
      %52 = dma.done [#allocation6], 2048
    $region21: #{tpu_custom_call.1} parent=1 // pred_fallthru
      _
    // Predicated region
    $region22: #{tpu_custom_call.1} parent=1 // pred_check
      _
    $region23: #{tpu_custom_call.1} parent=1 // pred_check_branch
      %54 = sbr.rel (0) target = $region25
    $region24: #{tpu_custom_call.1} parent=1 // pred_region
      %55 = dma.done [#allocation6], 512
    $region25: #{tpu_custom_call.1} parent=1 // pred_fallthru
      _
    %v56 = vld [vmem:[#allocation2] sm:$0xff]
    %v57 = vld [vmem:[#allocation2 + $0x8] sm:$0xff]
    %v58 = vld [vmem:[#allocation2 + $0x10] sm:$0xff]
    %v59 = vld [vmem:[#allocation2 + $0x18] sm:$0xff]
    %v60 = vld [vmem:[#allocation5] sm:$0xff]
    %v61 = vld [vmem:[#allocation5 + $0x8] sm:$0xff]
    %v62 = vld [vmem:[#allocation5 + $0x10] sm:$0xff]
    %v63 = vld [vmem:[#allocation5 + $0x18] sm:$0xff]
    %v64 = vld [vmem:[#allocation5 + $0x20] sm:$0xff]
    %v65 = vld [vmem:[#allocation5 + $0x28] sm:$0xff]
    %v66 = vld [vmem:[#allocation5 + $0x30] sm:$0xff]
    %v67 = vld [vmem:[#allocation5 + $0x38] sm:$0xff]
    %v68 = vld [vmem:[#allocation5 + $0x40] sm:$0xff]
    %v69 = vld [vmem:[#allocation5 + $0x48] sm:$0xff]
    %v70 = vld [vmem:[#allocation5 + $0x50] sm:$0xff]
    %v71 = vld [vmem:[#allocation5 + $0x58] sm:$0xff]
    %v72 = vld [vmem:[#allocation5 + $0x60] sm:$0xff]
    %v73 = vld [vmem:[#allocation5 + $0x68] sm:$0xff]
    %v74 = vld [vmem:[#allocation5 + $0x70] sm:$0xff]
    %v75 = vld [vmem:[#allocation5 + $0x78] sm:$0xff]
    %v76 = vld [vmem:[#allocation7] sm:$0xff]
    %v77 = vld [vmem:[#allocation7 + $0x8] sm:$0xff]
    %v78 = vld [vmem:[#allocation7 + $0x10] sm:$0xff]
    %v79 = vld [vmem:[#allocation7 + $0x18] sm:$0xff]
    %80 = vmatprep.subr.mxu0 0.0
    %81 = vmatpush1.msra.mxu0 %v60
    %82 = vmatprep.subr.mxu0 0.0
    %83 = vmatpush1.msra.mxu0 %v61
    %84 = vmatprep.subr.mxu0 0.0
    %85 = vmatpush1.msra.mxu0 %v62
    %86 = vmatprep.subr.mxu0 0.0
    %87 = vmatpush1.msra.mxu0 %v63
    %88 = vmatprep.subr.mxu0 0.0
    %89 = vmatpush1.msra.mxu0 %v64
    %90 = vmatprep.subr.mxu0 0.0
    %91 = vmatpush1.msra.mxu0 %v65
    %92 = vmatprep.subr.mxu0 0.0
    %93 = vmatpush1.msra.mxu0 %v66
    %94 = vmatprep.subr.mxu0 0.0
    %95 = vmatpush1.msra.mxu0 %v67
    %96 = vmatprep.subr.mxu0 0.0
    %97 = vmatpush1.msra.mxu0 %v68
    %98 = vmatprep.subr.mxu0 0.0
    %99 = vmatpush1.msra.mxu0 %v69
    %100 = vmatprep.subr.mxu0 0.0
    %101 = vmatpush1.msra.mxu0 %v70
    %102 = vmatprep.subr.mxu0 0.0
    %103 = vmatpush1.msra.mxu0 %v71
    %104 = vmatprep.subr.mxu0 0.0
    %105 = vmatpush1.msra.mxu0 %v72
    %106 = vmatprep.subr.mxu0 0.0
    %107 = vmatpush1.msra.mxu0 %v73
    %108 = vmatprep.subr.mxu0 0.0
    %109 = vmatpush1.msra.mxu0 %v74
    %110 = vmatprep.subr.mxu0 0.0
    %111 = vmatpush1.msra.mxu0 %v75
    %112 = vmatprep.subr.mxu0 0.0
    %113 = vmatpush1.msra.mxu0 0.0
    %114 = vmatprep.subr.mxu0 0.0
    %115 = vmatpush1.msra.mxu0 0.0
    %116 = vmatprep.subr.mxu0 0.0
    %117 = vmatpush1.msra.mxu0 0.0
    %118 = vmatprep.subr.mxu0 0.0
    %119 = vmatpush1.msra.mxu0 0.0
    %120 = vmatprep.subr.mxu0 0.0
    %121 = vmatpush1.msra.mxu0 0.0
    %122 = vmatprep.subr.mxu0 0.0
    %123 = vmatpush1.msra.mxu0 0.0
    %124 = vmatprep.subr.mxu0 0.0
    %125 = vmatpush1.msra.mxu0 0.0
    %126 = vmatprep.subr.mxu0 0.0
    %127 = vmatpush1.msra.mxu0 0.0
    %128 = vmatprep.subr.mxu0 0.0
    %129 = vmatpush1.msra.mxu0 0.0
    %130 = vmatprep.subr.mxu0 0.0
    %131 = vmatpush1.msra.mxu0 0.0
    %132 = vmatprep.subr.mxu0 0.0
    %133 = vmatpush1.msra.mxu0 0.0
    %134 = vmatprep.subr.mxu0 0.0
    %135 = vmatpush1.msra.mxu0 0.0
    %136 = vmatprep.subr.mxu0 0.0
    %137 = vmatpush1.msra.mxu0 0.0
    %138 = vmatprep.subr.mxu0 0.0
    %139 = vmatpush1.msra.mxu0 0.0
    %140 = vmatprep.subr.mxu0 0.0
    %141 = vmatpush1.msra.mxu0 0.0
    %142 = vmatprep.subr.mxu0 0.0
    %143 = vmatpush1.msra.mxu0 0.0
    %144 = vmatprep.mubr.f32.mxu0 0.0
    %145 = vmatmul.mubr.f32.gmra.mrb[0].mxu0 %v56
    %v146 = vpop.f32.mrb[0].mxu0
    %v147 = vadd.f32 %v76, %v146
    %v148 = vpop.f32.mrb[0].mxu0
    %149 = vmatprep.mubr.f32.mxu0 0.0
    %150 = vmatmul.mubr.f32.gmra.mrb[0].mxu0 %v57
    %v151 = vpop.f32.mrb[0].mxu0
    %v152 = vadd.f32 %v77, %v151
    %v153 = vpop.f32.mrb[0].mxu0
    %154 = vmatprep.mubr.f32.mxu0 0.0
    %155 = vmatmul.mubr.f32.gmra.mrb[0].mxu0 %v58
    %v156 = vpop.f32.mrb[0].mxu0
    %v157 = vadd.f32 %v78, %v156
    %v158 = vpop.f32.mrb[0].mxu0
    %159 = vmatprep.mubr.f32.mxu0 0.0
    %160 = vmatmul.mubr.f32.gmra.mrb[0].mxu0 %v59
    %v161 = vpop.f32.mrb[0].mxu0
    %v162 = vadd.f32 %v79, %v161
    %v163 = vpop.f32.mrb[0].mxu0
    %164 = vdwg.mxu0
    %165 = vst [vmem:[#allocation8] sm:$0xff] %v147
    %166 = vst [vmem:[#allocation8 + $0x8] sm:$0xff] %v152
    %167 = vst [vmem:[#allocation8 + $0x10] sm:$0xff] %v157
    %168 = vst [vmem:[#allocation8 + $0x18] sm:$0xff] %v162
    // Predicated region
    $region26: #{tpu_custom_call.1} parent=1 // pred_check
      _
    $region27: #{tpu_custom_call.1} parent=1 // pred_check_branch
      %170 = sbr.rel (0) target = $region29
    $region28: #{tpu_custom_call.1} parent=1 // pred_region
      %s172 = ssub.s32 512, 512
      %173 = vsyncadd [#allocation4], %s172
      %s174 = sshll.u32 [#allocation8], 4
      %s175 = int_to_ptr.vmem [resolvable:$true] %s174
      %180 = dma.vmem_to_hbm [thread:$0]  %s175, 512, %s3, [#allocation4], 128, 128, 8
    $region29: #{tpu_custom_call.1} parent=1 // pred_fallthru
      _
    // Predicated region
    $region30: #{tpu_custom_call.1} parent=1 // pred_check
      _
    $region31: #{tpu_custom_call.1} parent=1 // pred_check_branch
      %182 = sbr.rel (0) target = $region33
    $region32: #{tpu_custom_call.1} parent=1 // pred_region
      %183 = dma.done [#allocation4], 512
    $region33: #{tpu_custom_call.1} parent=1 // pred_fallthru
      _
    %184 = vsyncpa [#allocation3], 1
    %185 = vsyncpa [#allocation6], 1
    %186 = vsyncpa [#allocation4], 1

</llo_original>
